<compile_context>
chip_gen: v5e
topology: v5e:2x2
jax: 0.10.0
libtpu: 0.0.40
codegen_flags: <defaults>
</compile_context>

<pallas_src>
import functools

import jax
import jax.numpy as jnp
from jax.experimental import pallas as pl
from jax.experimental.pallas import tpu as pltpu

_LANE = 128
_MIN_ROWS = 16        # row-tile granularity (covers bf16 sublane packing)
_TILED_ROWS = 128     # row tile when the class axis must be split
_F32_TEMPS = 6        # rough count of per-element f32 temporaries live in-kernel


def _cdiv(a, b):
    return -(-a // b)


def _round_down(x, m):
    return (x // m) * m


def _vmem_limit_bytes():
    """Scoped VMEM limit with headroom, derived from the actual chip."""
    try:
        phys = int(pltpu.get_tpu_info().vmem_capacity_bytes)
    except Exception:
        phys = 64 << 20                       # conservative (v7x per-core VMEM)
    return phys * 3 // 4                      # ~48 MiB on v7x, ~96 MiB on v5e/v6e


def _choose_tiles(n, c, streamed_bytes, vmem_limit):
    """Pick (block_rows, block_c).

    streamed_bytes: summed itemsize of the arrays streamed per (row, class)
    element.  block_c == c means the class axis stays unsplit (single
    full-extent block -> no column masking, no 128-divisibility constraint).
    """
    budget = vmem_limit // 2                               # per-step working set
    bytes_per_elem = 2 * streamed_bytes + _F32_TEMPS * 4   # x2: double buffering

    rows_fit = budget // max(c * bytes_per_elem, 1)
    if rows_fit >= min(_MIN_ROWS, n):
        block_c = c                                        # unsplit class axis
        # Big tiles, but keep >=4 row blocks when N allows (v7x megacore).
        block_rows = min(rows_fit, max(_MIN_ROWS, _cdiv(n, 4)))
    else:
        # Vocab-scale C: split the class axis (online-softmax accumulation).
        block_rows = min(_TILED_ROWS, max(_MIN_ROWS, _cdiv(n, 4)))
        block_c = _round_down(budget // max(block_rows * bytes_per_elem, 1), _LANE)
        block_c = max(_LANE, min(block_c, c))

    if block_rows >= n:
        block_rows = n                     # full extent: exempt from the 8-row rule
    else:
        block_rows = max(_MIN_ROWS, _round_down(block_rows, _MIN_ROWS))
    return block_rows, block_c


# ----------------------------- kernels -----------------------------

def _ls_dense_kernel(x_ref, t_ref, o_ref, m_sc, l_sc, sw_sc, swx_sc, *,
                     confidence, smoothing, c_true, block_c, mask_cols):
    """Grid = (row_blocks, class_blocks); class axis reduced with online softmax.

    Per row:  loss = sum(w) * logsumexp(x) - sum(w * x),
              w_j  = confidence * t_j + smoothing / C.
    """
    k = pl.program_id(1)

    @pl.when(k == 0)
    def _():
        m_sc[...] = jnp.full_like(m_sc, -jnp.inf)
        l_sc[...] = jnp.zeros_like(l_sc)
        sw_sc[...] = jnp.zeros_like(sw_sc)
        swx_sc[...] = jnp.zeros_like(swx_sc)

    x = x_ref[...].astype(jnp.float32)
    t = t_ref[...].astype(jnp.float32)
    w = t if confidence == 1.0 else confidence * t
    if smoothing != 0.0:
        w = w + jnp.float32(smoothing / c_true)

    if mask_cols:                                  # only when C % block_c != 0
        br, bc = x.shape
        col = k * block_c + jax.lax.broadcasted_iota(jnp.int32, (br, bc), 1)
        valid = col < c_true
        x = jnp.where(valid, x, jnp.float32(-1e30))
        w = jnp.where(valid, w, jnp.float32(0.0))

    m_prev = m_sc[...]
    m_new = jnp.maximum(m_prev, jnp.max(x, axis=-1, keepdims=True))
    l_sc[...] = (jnp.exp(m_prev - m_new) * l_sc[...]
                 + jnp.sum(jnp.exp(x - m_new), axis=-1, keepdims=True))
    m_sc[...] = m_new
    sw_sc[...] = sw_sc[...] + jnp.sum(w, axis=-1, keepdims=True)
    swx_sc[...] = swx_sc[...] + jnp.sum(w * x, axis=-1, keepdims=True)

    @pl.when(k == pl.num_programs(1) - 1)
    def _():
        lse = m_sc[...] + jnp.log(l_sc[...])
        o_ref[...] = sw_sc[...] * lse - swx_sc[...]


def _ls_hard_kernel(x_ref, lbl_ref, o_ref, m_sc, l_sc, swx_sc, *,
                    confidence, smoothing, c_true, block_c, mask_cols):
    """Integer-label path (streams only the logits).  sum(w) is the constant
    confidence + smoothing, so only logsumexp and sum(w*x) are accumulated."""
    k = pl.program_id(1)

    @pl.when(k == 0)
    def _():
        m_sc[...] = jnp.full_like(m_sc, -jnp.inf)
        l_sc[...] = jnp.zeros_like(l_sc)
        swx_sc[...] = jnp.zeros_like(swx_sc)

    x = x_ref[...].astype(jnp.float32)
    lbl = lbl_ref[...]                              # (block_rows, 1) int32
    br, bc = x.shape
    col = k * block_c + jax.lax.broadcasted_iota(jnp.int32, (br, bc), 1)

    onehot = (col == lbl).astype(jnp.float32)
    w = onehot if confidence == 1.0 else confidence * onehot
    if smoothing != 0.0:
        w = w + jnp.float32(smoothing / c_true)

    if mask_cols:                                   # only when C % block_c != 0
        valid = col < c_true
        x = jnp.where(valid, x, jnp.float32(-1e30))
        if smoothing != 0.0:                        # onehot never hits invalid cols
            w = jnp.where(valid, w, jnp.float32(0.0))

    m_prev = m_sc[...]
    m_new = jnp.maximum(m_prev, jnp.max(x, axis=-1, keepdims=True))
    l_sc[...] = (jnp.exp(m_prev - m_new) * l_sc[...]
                 + jnp.sum(jnp.exp(x - m_new), axis=-1, keepdims=True))
    m_sc[...] = m_new
    swx_sc[...] = swx_sc[...] + jnp.sum(w * x, axis=-1, keepdims=True)

    @pl.when(k == pl.num_programs(1) - 1)
    def _():
        lse = m_sc[...] + jnp.log(l_sc[...])
        o_ref[...] = jnp.float32(confidence + smoothing) * lse - swx_sc[...]


# ----------------------------- runners / wrappers -----------------------------

def _run_per_row(kernel, operands, in_specs, n, block_rows, block_c, c,
                 num_scratch, vmem_limit):
    grid = (pl.cdiv(n, block_rows), pl.cdiv(c, block_c))
    return pl.pallas_call(
        kernel,
        out_shape=jax.ShapeDtypeStruct((n, 1), jnp.float32),
        grid_spec=pltpu.PrefetchScalarGridSpec(
            num_scalar_prefetch=0,
            grid=grid,
            in_specs=in_specs,
            out_specs=pl.BlockSpec((block_rows, 1), lambda i, k: (i, 0)),
            scratch_shapes=[pltpu.VMEM((block_rows, 1), jnp.float32)
                            for _ in range(num_scratch)],
        ),
        compiler_params=pltpu.CompilerParams(
            dimension_semantics=("parallel", "arbitrary"),
            vmem_limit_bytes=int(vmem_limit),
        ),
    )(*operands)


def label_smoothing_loss(x, target, *, smoothing=0.1, block_rows=None, block_c=None):
    """Training-mode LabelSmoothing.forward with dense (soft / one-hot) float targets.

    Prefer `label_smoothing_hard_loss` when targets are one-hot (halves HBM
    traffic) and feed bf16 logits/targets when available (kernel upcasts).
    """
    n, c = x.shape
    assert target.shape == (n, c)
    confidence = 1.0 - smoothing

    vmem_limit = _vmem_limit_bytes()
    streamed = jnp.dtype(x.dtype).itemsize + jnp.dtype(target.dtype).itemsize
    auto_br, auto_bc = _choose_tiles(n, c, streamed, vmem_limit)
    br = auto_br if block_rows is None else block_rows
    bc = auto_bc if block_c is None else block_c
    mask_cols = (c % bc) != 0

    kernel = functools.partial(
        _ls_dense_kernel, confidence=confidence, smoothing=smoothing,
        c_true=c, block_c=bc, mask_cols=mask_cols)
    in_specs = [pl.BlockSpec((br, bc), lambda i, k: (i, k)),
                pl.BlockSpec((br, bc), lambda i, k: (i, k))]
    per_row = _run_per_row(kernel, (x, target), in_specs, n, br, bc, c,
                           num_scratch=4, vmem_limit=vmem_limit)
    return jnp.sum(per_row) / jnp.float32(n)


def label_smoothing_hard_loss(x, labels, *, smoothing=0.1, block_rows=None, block_c=None):
    """LabelSmoothing with integer class labels (fast path: only logits stream)."""
    n, c = x.shape
    assert labels.shape == (n,)
    confidence = 1.0 - smoothing

    vmem_limit = _vmem_limit_bytes()
    streamed = jnp.dtype(x.dtype).itemsize
    auto_br, auto_bc = _choose_tiles(n, c, streamed, vmem_limit)
    br = auto_br if block_rows is None else block_rows
    bc = auto_bc if block_c is None else block_c
    mask_cols = (c % bc) != 0

    lbl2d = labels.astype(jnp.int32).reshape(n, 1)
    kernel = functools.partial(
        _ls_hard_kernel, confidence=confidence, smoothing=smoothing,
        c_true=c, block_c=bc, mask_cols=mask_cols)
    in_specs = [pl.BlockSpec((br, bc), lambda i, k: (i, k)),
                pl.BlockSpec((br, 1), lambda i, k: (i, 0))]
    per_row = _run_per_row(kernel, (x, lbl2d), in_specs, n, br, bc, c,
                           num_scratch=3, vmem_limit=vmem_limit)
    return jnp.sum(per_row) / jnp.float32(n)


def cross_entropy_loss(x, labels):
    """Eval-mode forward: F.cross_entropy(x, labels) with mean reduction."""
    # TODO(synk): ignore_index / non-mean reductions / probability-target
    # variants of eval-mode F.cross_entropy are not implemented (module defaults only).
    return label_smoothing_hard_loss(x, labels, smoothing=0.0)


# ----------------------------- pure-JAX references -----------------------------

def _reference_train(x, target, smoothing=0.1):
    confidence = 1.0 - smoothing
    logprobs = jax.nn.log_softmax(x.astype(jnp.float32), axis=-1)
    nll = jnp.sum(-logprobs * target.astype(jnp.float32), axis=-1)
    smooth = -jnp.mean(logprobs, axis=-1)
    return jnp.mean(confidence * nll + smoothing * smooth)


def _reference_eval(x, labels):
    logprobs = jax.nn.log_softmax(x.astype(jnp.float32), axis=-1)
    return jnp.mean(-jnp.take_along_axis(logprobs, labels[:, None], axis=-1))


if __name__ == "__main__":
    key = jax.random.PRNGKey(0)
    k1, k2, k3, k4, k5, k6 = jax.random.split(key, 6)

    # Case 1: one-hot targets, C=32 (true-extent class block: no padding, no masking).
    N1, C1 = 8, 32
    x1 = jax.random.normal(k1, (N1, C1), dtype=jnp.float32)
    labels1 = jax.random.randint(k2, (N1,), 0, C1)
    target1 = jax.nn.one_hot(labels1, C1, dtype=jnp.float32)
    loss_dense = jax.block_until_ready(label_smoothing_loss(x1, target1, smoothing=0.1))
    loss_hard = jax.block_until_ready(label_smoothing_hard_loss(x1, labels1, smoothing=0.1))
    loss_eval = jax.block_until_ready(cross_entropy_loss(x1, labels1))
    ref1 = _reference_train(x1, target1, smoothing=0.1)
    ref1e = _reference_eval(x1, labels1)
    assert jnp.allclose(loss_dense, ref1, atol=1e-5, rtol=1e-4), (loss_dense, ref1)
    assert jnp.allclose(loss_hard, ref1, atol=1e-5, rtol=1e-4), (loss_hard, ref1)
    assert jnp.allclose(loss_eval, ref1e, atol=1e-5, rtol=1e-4), (loss_eval, ref1e)

    # Case 2: soft (non-one-hot) targets, N not a multiple of the row tile
    # (exercises the ragged last row block, no padding anywhere).
    N2, C2 = 24, 256
    x2 = jax.random.normal(k3, (N2, C2), dtype=jnp.float32)
    target2 = jax.nn.softmax(jax.random.normal(k4, (N2, C2), dtype=jnp.float32), axis=-1)
    loss2 = jax.block_until_ready(label_smoothing_loss(x2, target2, smoothing=0.1))
    ref2 = _reference_train(x2, target2, smoothing=0.1)
    assert jnp.allclose(loss2, ref2, atol=1e-5, rtol=1e-4), (loss2, ref2)

    # Case 3: force the class-tiled (online-softmax) path with a ragged class
    # block (320 % 128 != 0) and a ragged row block (20 % 16 != 0).
    N3, C3 = 20, 320
    x3 = jax.random.normal(k5, (N3, C3), dtype=jnp.float32)
    labels3 = jax.random.randint(k6, (N3,), 0, C3)
    target3 = jax.nn.one_hot(labels3, C3, dtype=jnp.float32)
    loss3d = jax.block_until_ready(
        label_smoothing_loss(x3, target3, smoothing=0.1, block_rows=16, block_c=128))
    loss3h = jax.block_until_ready(
        label_smoothing_hard_loss(x3, labels3, smoothing=0.1, block_rows=16, block_c=128))
    ref3 = _reference_train(x3, target3, smoothing=0.1)
    assert jnp.allclose(loss3d, ref3, atol=1e-5, rtol=1e-4), (loss3d, ref3)
    assert jnp.allclose(loss3h, ref3, atol=1e-5, rtol=1e-4), (loss3h, ref3)

    # Case 4: bf16 logits on the hard-label path (half the streamed bytes).
    N4, C4 = 16, 192
    x4 = jax.random.normal(k1, (N4, C4), dtype=jnp.bfloat16)
    labels4 = jax.random.randint(k2, (N4,), 0, C4)
    loss4 = jax.block_until_ready(label_smoothing_hard_loss(x4, labels4, smoothing=0.1))
    target4 = jax.nn.one_hot(labels4, C4, dtype=jnp.float32)
    ref4 = _reference_train(x4, target4, smoothing=0.1)
    assert jnp.allclose(loss4, ref4, atol=1e-4, rtol=1e-4), (loss4, ref4)

    print("KERNEL_OK")
</pallas_src>

<mosaic_0001>
module attributes {stable_mosaic.version = 11 : i64} {
  func.func @_ls_dense_kernel(%arg0: i32, %arg1: i32, %arg2: memref<8x32xf32, #tpu.memory_space<vmem>>, %arg3: memref<8x32xf32, #tpu.memory_space<vmem>>, %arg4: memref<8x1xf32, #tpu.memory_space<vmem>>, %arg5: memref<8x1xf32, #tpu.memory_space<vmem>>, %arg6: memref<8x1xf32, #tpu.memory_space<vmem>>, %arg7: memref<8x1xf32, #tpu.memory_space<vmem>>, %arg8: memref<8x1xf32, #tpu.memory_space<vmem>>) attributes {dimension_semantics = [#tpu.dimension_semantics<parallel>, #tpu.dimension_semantics<arbitrary>], iteration_bounds = array<i64: 1, 1>, scalar_prefetch = 0 : i64, scratch_operands = 4 : i64, tpu.core_type = #tpu.core_type<tc>, window_params = [{transform_indices = @transform_0, window_bounds = array<i64: 8, 32>}, {transform_indices = @transform_1, window_bounds = array<i64: 8, 32>}, {transform_indices = @transform_2, window_bounds = array<i64: 8, 1>}]} {
    %c0_i32 = arith.constant 0 : i32
    %0 = arith.cmpi eq, %arg1, %c0_i32 : i32
    %1 = arith.extui %0 : i1 to i32
    %c0_i32_0 = arith.constant 0 : i32
    %2 = arith.cmpi ne, %1, %c0_i32_0 : i32
    scf.if %2 {
      %cst_27 = arith.constant 0xFF800000 : f32
      %39 = vector.broadcast %cst_27 : f32 to vector<8x1xf32>
      %c0_28 = arith.constant 0 : index
      %c0_29 = arith.constant 0 : index
      %40 = vector.load %arg5[%c0_28, %c0_29] : memref<8x1xf32, #tpu.memory_space<vmem>>, vector<8x1xf32>
      tpu.vector_store %arg5[%c0_28, %c0_29], %39 {strides = array<i32>} : memref<8x1xf32, #tpu.memory_space<vmem>>, vector<8x1xf32>,
      %cst_30 = arith.constant 0.000000e+00 : f32
      %41 = vector.broadcast %cst_30 : f32 to vector<8x1xf32>
      %c0_31 = arith.constant 0 : index
      %c0_32 = arith.constant 0 : index
      %42 = vector.load %arg6[%c0_31, %c0_32] : memref<8x1xf32, #tpu.memory_space<vmem>>, vector<8x1xf32>
      tpu.vector_store %arg6[%c0_31, %c0_32], %41 {strides = array<i32>} : memref<8x1xf32, #tpu.memory_space<vmem>>, vector<8x1xf32>,
      %cst_33 = arith.constant 0.000000e+00 : f32
      %43 = vector.broadcast %cst_33 : f32 to vector<8x1xf32>
      %c0_34 = arith.constant 0 : index
      %c0_35 = arith.constant 0 : index
      %44 = vector.load %arg7[%c0_34, %c0_35] : memref<8x1xf32, #tpu.memory_space<vmem>>, vector<8x1xf32>
      tpu.vector_store %arg7[%c0_34, %c0_35], %43 {strides = array<i32>} : memref<8x1xf32, #tpu.memory_space<vmem>>, vector<8x1xf32>,
      %cst_36 = arith.constant 0.000000e+00 : f32
      %45 = vector.broadcast %cst_36 : f32 to vector<8x1xf32>
      %c0_37 = arith.constant 0 : index
      %c0_38 = arith.constant 0 : index
      %46 = vector.load %arg8[%c0_37, %c0_38] : memref<8x1xf32, #tpu.memory_space<vmem>>, vector<8x1xf32>
      tpu.vector_store %arg8[%c0_37, %c0_38], %45 {strides = array<i32>} : memref<8x1xf32, #tpu.memory_space<vmem>>, vector<8x1xf32>,
    } else {
    }
    %c0 = arith.constant 0 : index
    %c0_1 = arith.constant 0 : index
    %3 = vector.load %arg2[%c0, %c0_1] : memref<8x32xf32, #tpu.memory_space<vmem>>, vector<8x32xf32>
    %c0_2 = arith.constant 0 : index
    %c0_3 = arith.constant 0 : index
    %4 = vector.load %arg3[%c0_2, %c0_3] : memref<8x32xf32, #tpu.memory_space<vmem>>, vector<8x32xf32>
    %cst = arith.constant 0.899999976 : f32
    %5 = vector.broadcast %cst : f32 to vector<8x32xf32>
    %6 = arith.mulf %5, %4 : vector<8x32xf32>
    %cst_4 = arith.constant 3.125000e-03 : f32
    %7 = vector.broadcast %cst_4 : f32 to vector<8x32xf32>
    %8 = arith.addf %6, %7 : vector<8x32xf32>
    %c0_5 = arith.constant 0 : index
    %c0_6 = arith.constant 0 : index
    %9 = vector.load %arg5[%c0_5, %c0_6] : memref<8x1xf32, #tpu.memory_space<vmem>>, vector<8x1xf32>
    %cst_7 = arith.constant dense<0xFF800000> : vector<8xf32>
    %10 = vector.multi_reduction <maximumf>, %3, %cst_7 [1] : vector<8x32xf32> to vector<8xf32>
    %11 = vector.shape_cast %10 : vector<8xf32> to vector<8x1xf32>
    %12 = arith.maximumf %9, %11 : vector<8x1xf32>
    %13 = arith.subf %9, %12 : vector<8x1xf32>
    %14 = math.exp %13 : vector<8x1xf32>
    %c0_8 = arith.constant 0 : index
    %c0_9 = arith.constant 0 : index
    %15 = vector.load %arg6[%c0_8, %c0_9] : memref<8x1xf32, #tpu.memory_space<vmem>>, vector<8x1xf32>
    %16 = arith.mulf %14, %15 : vector<8x1xf32>
    %17 = vector.broadcast %12 : vector<8x1xf32> to vector<8x32xf32>
    %18 = arith.subf %3, %17 : vector<8x32xf32>
    %19 = math.exp %18 : vector<8x32xf32>
    %cst_10 = arith.constant dense<0.000000e+00> : vector<8xf32>
    %20 = vector.multi_reduction <add>, %19, %cst_10 [1] : vector<8x32xf32> to vector<8xf32>
    %21 = vector.shape_cast %20 : vector<8xf32> to vector<8x1xf32>
    %22 = arith.addf %16, %21 : vector<8x1xf32>
    %c0_11 = arith.constant 0 : index
    %c0_12 = arith.constant 0 : index
    %23 = vector.load %arg6[%c0_11, %c0_12] : memref<8x1xf32, #tpu.memory_space<vmem>>, vector<8x1xf32>
    tpu.vector_store %arg6[%c0_11, %c0_12], %22 {strides = array<i32>} : memref<8x1xf32, #tpu.memory_space<vmem>>, vector<8x1xf32>,
    %c0_13 = arith.constant 0 : index
    %c0_14 = arith.constant 0 : index
    %24 = vector.load %arg5[%c0_13, %c0_14] : memref<8x1xf32, #tpu.memory_space<vmem>>, vector<8x1xf32>
    tpu.vector_store %arg5[%c0_13, %c0_14], %12 {strides = array<i32>} : memref<8x1xf32, #tpu.memory_space<vmem>>, vector<8x1xf32>,
    %c0_15 = arith.constant 0 : index
    %c0_16 = arith.constant 0 : index
    %25 = vector.load %arg7[%c0_15, %c0_16] : memref<8x1xf32, #tpu.memory_space<vmem>>, vector<8x1xf32>
    %cst_17 = arith.constant dense<0.000000e+00> : vector<8xf32>
    %26 = vector.multi_reduction <add>, %8, %cst_17 [1] : vector<8x32xf32> to vector<8xf32>
    %27 = vector.shape_cast %26 : vector<8xf32> to vector<8x1xf32>
    %28 = arith.addf %25, %27 : vector<8x1xf32>
    %c0_18 = arith.constant 0 : index
    %c0_19 = arith.constant 0 : index
    %29 = vector.load %arg7[%c0_18, %c0_19] : memref<8x1xf32, #tpu.memory_space<vmem>>, vector<8x1xf32>
    tpu.vector_store %arg7[%c0_18, %c0_19], %28 {strides = array<i32>} : memref<8x1xf32, #tpu.memory_space<vmem>>, vector<8x1xf32>,
    %c0_20 = arith.constant 0 : index
    %c0_21 = arith.constant 0 : index
    %30 = vector.load %arg8[%c0_20, %c0_21] : memref<8x1xf32, #tpu.memory_space<vmem>>, vector<8x1xf32>
    %31 = arith.mulf %8, %3 : vector<8x32xf32>
    %cst_22 = arith.constant dense<0.000000e+00> : vector<8xf32>
    %32 = vector.multi_reduction <add>, %31, %cst_22 [1] : vector<8x32xf32> to vector<8xf32>
    %33 = vector.shape_cast %32 : vector<8xf32> to vector<8x1xf32>
    %34 = arith.addf %30, %33 : vector<8x1xf32>
    %c0_23 = arith.constant 0 : index
    %c0_24 = arith.constant 0 : index
    %35 = vector.load %arg8[%c0_23, %c0_24] : memref<8x1xf32, #tpu.memory_space<vmem>>, vector<8x1xf32>
    tpu.vector_store %arg8[%c0_23, %c0_24], %34 {strides = array<i32>} : memref<8x1xf32, #tpu.memory_space<vmem>>, vector<8x1xf32>,
    %c0_i32_25 = arith.constant 0 : i32
    %36 = arith.cmpi eq, %arg1, %c0_i32_25 : i32
    %37 = arith.extui %36 : i1 to i32
    %c0_i32_26 = arith.constant 0 : i32
    %38 = arith.cmpi ne, %37, %c0_i32_26 : i32
    scf.if %38 {
      %c0_27 = arith.constant 0 : index
      %c0_28 = arith.constant 0 : index
      %39 = vector.load %arg5[%c0_27, %c0_28] : memref<8x1xf32, #tpu.memory_space<vmem>>, vector<8x1xf32>
      %c0_29 = arith.constant 0 : index
      %c0_30 = arith.constant 0 : index
      %40 = vector.load %arg6[%c0_29, %c0_30] : memref<8x1xf32, #tpu.memory_space<vmem>>, vector<8x1xf32>
      %41 = math.log %40 : vector<8x1xf32>
      %42 = arith.addf %39, %41 : vector<8x1xf32>
      %c0_31 = arith.constant 0 : index
      %c0_32 = arith.constant 0 : index
      %43 = vector.load %arg7[%c0_31, %c0_32] : memref<8x1xf32, #tpu.memory_space<vmem>>, vector<8x1xf32>
      %44 = arith.mulf %43, %42 : vector<8x1xf32>
      %c0_33 = arith.constant 0 : index
      %c0_34 = arith.constant 0 : index
      %45 = vector.load %arg8[%c0_33, %c0_34] : memref<8x1xf32, #tpu.memory_space<vmem>>, vector<8x1xf32>
      %46 = arith.subf %44, %45 : vector<8x1xf32>
      %c0_35 = arith.constant 0 : index
      %c0_36 = arith.constant 0 : index
      %47 = vector.load %arg4[%c0_35, %c0_36] : memref<8x1xf32, #tpu.memory_space<vmem>>, vector<8x1xf32>
      tpu.vector_store %arg4[%c0_35, %c0_36], %46 {strides = array<i32>} : memref<8x1xf32, #tpu.memory_space<vmem>>, vector<8x1xf32>,
    } else {
    }
    return
  }
  func.func @transform_0(%arg0: i32, %arg1: i32) -> (i32, i32) {
    %c0_i32 = arith.constant 0 : i32
    return %arg0, %arg1 : i32, i32
  }
  func.func @transform_1(%arg0: i32, %arg1: i32) -> (i32, i32) {
    %c0_i32 = arith.constant 0 : i32
    return %arg0, %arg1 : i32, i32
  }
  func.func @transform_2(%arg0: i32, %arg1: i32) -> (i32, i32) {
    %c0_i32 = arith.constant 0 : i32
    %c0_i32_0 = arith.constant 0 : i32
    return %arg0, %c0_i32 : i32, i32
  }
}

</mosaic_0001>

<llo_original>
// kernel: tpu_custom_call.1
$region0: #{tpu_custom_call.1}
  #allocation0 [shape = 'u32[]', space=smem, size = 0x4, offset = 0x4, fixed_abs, tag = 'smem constant byte address 0x4 - core index']
  #allocation1 [shape = 'u32[72,128]{1,0:T(1,128)}', space=vmem, size = 0x9000, scoped, tag = 'internal scratch']
  #allocation2 [shape = 'f32[8,1]{1,0:T(8,128)}', space=vmem, size = 0x1000, scoped, tag = 'scratch operand']
  #allocation3 [shape = 'f32[8,1]{1,0:T(8,128)}', space=vmem, size = 0x1000, scoped, tag = 'scratch operand']
  #allocation4 [shape = 'f32[8,1]{1,0:T(8,128)}', space=vmem, size = 0x1000, scoped, tag = 'scratch operand']
  #allocation5 [shape = 'f32[8,1]{1,0:T(8,128)}', space=vmem, size = 0x1000, scoped, tag = 'scratch operand']
  %s0 = inlined_call_operand.hbm [shape: f32[8,32], index: 0, kind: input, shape index: {}]
  %s1 = inlined_call_operand.hbm [shape: f32[8,32], index: 1, kind: input, shape index: {}]
  %s2 = inlined_call_operand.vmem [shape: f32[8,1], index: 2, kind: output, shape index: {}]
  %s3 = sld [smem:[#allocation0]]
  $region34: #{tpu_custom_call.1} parent=0
    _
  %s5 = ssub.s32 1, %s3
  %s6 = scalar_select 0, %s5, %s3
  $region1: #{tpu_custom_call.1} parent=0
    #allocation6 [shape = 'u8[4096]{0}', space=vmem, size = 0x1000, scoped, tag = 'input window, operand 0, single buffered']
    #allocation7 [shape = 's32[1]{0}', space=sflag, size = 0x4, scoped, tag = 'scoped memory for tpu_custom_call.1']
    #allocation8 [shape = 'u8[4096]{0}', space=vmem, size = 0x1000, scoped, tag = 'input window, operand 1, single buffered']
    #allocation9 [shape = 's32[1]{0}', space=sflag, size = 0x4, scoped, tag = 'scoped memory for tpu_custom_call.1']
    %7 = vsyncpa [#allocation7], 0
    %8 = vsyncpa [#allocation9], 0
    // Predicated region
    $region2: #{tpu_custom_call.1} parent=1 // pred_check
      _
    $region3: #{tpu_custom_call.1} parent=1 // pred_check_branch
      %10 = sbr.rel (0) target = $region5
    $region4: #{tpu_custom_call.1} parent=1 // pred_region
      %12 = vsyncadd [#allocation7], 0
      %s14 = sshll.u32 %s0, 4
      %s15 = int_to_ptr.hbm [resolvable:$true] %s14
      %s16 = sshll.u32 [#allocation6], 4
      %s17 = int_to_ptr.vmem [resolvable:$true] %s16
      %19 = dma.hbm_to_vmem [thread:$0]  %s15, 128, %s17, [#allocation7]
    $region5: #{tpu_custom_call.1} parent=1 // pred_fallthru
      _
    // Predicated region
    $region6: #{tpu_custom_call.1} parent=1 // pred_check
      _
    $region7: #{tpu_custom_call.1} parent=1 // pred_check_branch
      %21 = sbr.rel (0) target = $region9
    $region8: #{tpu_custom_call.1} parent=1 // pred_region
      %23 = vsyncadd [#allocation9], 0
      %s25 = sshll.u32 %s1, 4
      %s26 = int_to_ptr.hbm [resolvable:$true] %s25
      %s27 = sshll.u32 [#allocation8], 4
      %s28 = int_to_ptr.vmem [resolvable:$true] %s27
      %30 = dma.hbm_to_vmem [thread:$0]  %s26, 128, %s28, [#allocation9]
    $region9: #{tpu_custom_call.1} parent=1 // pred_fallthru
      _
    // Predicated region
    $region10: #{tpu_custom_call.1} parent=1 // pred_check
      _
    $region11: #{tpu_custom_call.1} parent=1 // pred_check_branch
      %32 = sbr.rel (0) target = $region13
    $region12: #{tpu_custom_call.1} parent=1 // pred_region
      %34 = dma.done [#allocation7], 128
    $region13: #{tpu_custom_call.1} parent=1 // pred_fallthru
      _
    // Predicated region
    $region14: #{tpu_custom_call.1} parent=1 // pred_check
      _
    $region15: #{tpu_custom_call.1} parent=1 // pred_check_branch
      %36 = sbr.rel (0) target = $region17
    $region16: #{tpu_custom_call.1} parent=1 // pred_region
      %38 = dma.done [#allocation9], 128
    $region17: #{tpu_custom_call.1} parent=1 // pred_fallthru
      _
    %p39 = scmp.eq.s32.totalorder 0, 0
    // Predicated region
    $region18: #{tpu_custom_call.1} parent=1 // pred_check
      %p40 = pneg %p39
    $region19: #{tpu_custom_call.1} parent=1 // pred_check_branch
      %42 = sbr.rel (%p40) target = $region21
    $region20: #{tpu_custom_call.1} parent=1 // pred_region
      %vm43 = vcmask 7168
      %44 = vst.msk [vmem:[#allocation2] sm:$0xff] %vm43, -inf
      %45 = vst.msk [vmem:[#allocation3] sm:$0xff] %vm43, 0.0
      %46 = vst.msk [vmem:[#allocation4] sm:$0xff] %vm43, 0.0
      %47 = vst.msk [vmem:[#allocation5] sm:$0xff] %vm43, 0.0
    $region21: #{tpu_custom_call.1} parent=1 // pred_fallthru
      _
    %v48 = vld [vmem:[#allocation6] sm:$0xff]
    %v49 = vld [vmem:[#allocation8] sm:$0xff]
    %v50 = vmul.f32 %v49, 0.9
    %v51 = vadd.f32 %v50, 0.003125
    %v52 = vld [vmem:[#allocation2] sm:$0xff]
    %vm53 = vcmask 261120
    %v54 = vsel %vm53, %v48, -inf
    %55 = vmax.xlane.f32.xlu0 %v54
    %v56 = vpop.xlane.xlu0 %55
    %v57 = vmax.f32 %v52, %v56
    %v58 = vsub.f32 %v52, %v57
    %v59 = vmul.f32 %v58, 1.442695
    %v60 = vpow.pop %v59
    %v61 = vld [vmem:[#allocation3] sm:$0xff]
    %v62 = vmul.f32 %v60, %v61
    %64 = vset.pattern.permute.xlu0 0
    %65 = vperm.xlu0 %64, %v57
    %v66 = vpop.permute.xlu0 %65
    %v68 = vsub.f32 %v48, %v66
    %v69 = vmul.f32 %v68, 1.442695
    %v70 = vpow.pop %v69
    %v71 = vsel %vm53, %v70, 0.0
    %72 = vadd.xlane.f32.xlu0 %v71
    %v73 = vpop.xlane.xlu0 %72
    %v74 = vadd.f32 %v62, %v73
    %vm75 = vcmask 7168
    %76 = vst.msk [vmem:[#allocation3] sm:$0xff] %vm75, %v74
    %77 = vst.msk [vmem:[#allocation2] sm:$0xff] %vm75, %v57
    %v78 = vld [vmem:[#allocation4] sm:$0xff]
    %v79 = vsel %vm53, %v51, 0.0
    %80 = vadd.xlane.f32.xlu0 %v79
    %v81 = vpop.xlane.xlu0 %80
    %v82 = vadd.f32 %v78, %v81
    %83 = vst.msk [vmem:[#allocation4] sm:$0xff] %vm75, %v82
    %v84 = vld [vmem:[#allocation5] sm:$0xff]
    %v85 = vmul.f32 %v51, %v48
    %v86 = vsel %vm53, %v85, 0.0
    %87 = vadd.xlane.f32.xlu0 %v86
    %v88 = vpop.xlane.xlu0 %87
    %v89 = vadd.f32 %v84, %v88
    %90 = vst.msk [vmem:[#allocation5] sm:$0xff] %vm75, %v89
    // Predicated region
    $region22: #{tpu_custom_call.1} parent=1 // pred_check
      %p91 = pneg %p39
    $region23: #{tpu_custom_call.1} parent=1 // pred_check_branch
      %93 = sbr.rel (%p91) target = $region25
    $region24: #{tpu_custom_call.1} parent=1 // pred_region
      %v94 = vld [vmem:[#allocation2] sm:$0xff]
      %v95 = vld [vmem:[#allocation3] sm:$0xff]
      %v96 = vlog2.pop %v95
      %v97 = vmul.f32 %v96, 0.6931472
      %v98 = vadd.f32 %v94, %v97
      %v99 = vld [vmem:[#allocation4] sm:$0xff]
      %v100 = vmul.f32 %v99, %v98
      %v101 = vld [vmem:[#allocation5] sm:$0xff]
      %v102 = vsub.f32 %v100, %v101
      %103 = vst.msk [vmem:[%s2] sm:$0xff] %vm75, %v102
    $region25: #{tpu_custom_call.1} parent=1 // pred_fallthru
      _
    // Predicated region
    $region26: #{tpu_custom_call.1} parent=1 // pred_check
      _
    $region27: #{tpu_custom_call.1} parent=1 // pred_check_branch
      %105 = sbr.rel (0) target = $region29
    $region28: #{tpu_custom_call.1} parent=1 // pred_region
      _
    $region29: #{tpu_custom_call.1} parent=1 // pred_fallthru
      _
    // Predicated region
    $region30: #{tpu_custom_call.1} parent=1 // pred_check
      _
    $region31: #{tpu_custom_call.1} parent=1 // pred_check_branch
      %107 = sbr.rel (0) target = $region33
    $region32: #{tpu_custom_call.1} parent=1 // pred_region
      _
    $region33: #{tpu_custom_call.1} parent=1 // pred_fallthru
      _
    %108 = vsyncpa [#allocation7], 1
    %109 = vsyncpa [#allocation9], 1

</llo_original>
